<compile_context>
chip_gen: v6e
topology: v6e:2x2x1
jax: 0.10.0
libtpu: 0.0.40
codegen_flags: <defaults>
</compile_context>

<pallas_src>
import functools

import jax
import jax.numpy as jnp
from jax import lax
from jax.experimental import pallas as pl
from jax.experimental.pallas import tpu as pltpu


_LANE_CANDIDATES = (2048, 1024, 512, 256, 128)
_MAX_BLOCK_BYTES = 2 * 1024 * 1024   # ~2 MiB/block; double-buffered in+out ~8 MiB


def _round_up(a, b):
    return (a + b - 1) // b * b


def _cdiv(a, b):
    return (a + b - 1) // b


def _lrelu_drop_kernel(seed_ref, x_ref, o_ref, *, negative_slope, keep_prob,
                       block_rows, lanes):
    x = x_ref[...]

    # LeakyReLU
    y = jnp.where(x > 0, x, x * negative_slope)

    if keep_prob >= 1.0:              # dropout disabled -> pure LeakyReLU
        o_ref[...] = y
        return

    # Fold the survivor scale into y once.
    y_scaled = y * jnp.asarray(1.0 / keep_prob, dtype=x.dtype)

    # Counter-based PRNG: murmur3-style finalizer of (global element index, seed).
    # Plain uint32 VPU ops -> portable lowering, no mask streamed from HBM.
    shape = x.shape
    row = lax.broadcasted_iota(jnp.int32, shape, 0)
    col = lax.broadcasted_iota(jnp.int32, shape, 1)
    base_row = pl.program_id(0) * block_rows
    idx = ((base_row + row) * lanes + col).astype(jnp.uint32)
    seed = seed_ref[0].astype(jnp.uint32)

    h = idx * jnp.uint32(0x9E3779B1) + seed * jnp.uint32(0x85EBCA77)
    h = h ^ (h >> 16)
    h = h * jnp.uint32(0x85EBCA6B)
    h = h ^ (h >> 13)
    h = h * jnp.uint32(0xC2B2AE35)
    h = h ^ (h >> 16)

    # Keep with probability keep_prob: single UNSIGNED threshold compare.
    threshold = jnp.uint32(min(int(keep_prob * float(2 ** 32)), 2 ** 32 - 1))
    keep = h < threshold

    o_ref[...] = jnp.where(keep, y_scaled, jnp.zeros_like(y_scaled))


def lrelu_drop(x, *, negative_slope=0.01, dropout_rate=0.1, seed=0):
    """Fused LeakyReLU + Dropout (training mode) for any input shape."""
    if not 0.0 <= dropout_rate < 1.0:
        raise ValueError("dropout_rate must be in [0, 1)")
    orig_shape = x.shape
    total = x.size
    if total == 0:
        return x
    keep_prob = 1.0 - dropout_rate

    # Lane-dense flat view (free reshape in the common case).
    lanes = next((c for c in _LANE_CANDIDATES if total % c == 0), None)
    if lanes is None:
        # TODO(synk): flat sizes not divisible by 128 take a pad+slice path
        # (one extra HBM pass); any 128-aligned size avoids it entirely.
        lanes = 128
        rows = _cdiv(total, lanes)
        flat = jnp.pad(x.reshape(-1), (0, rows * lanes - total))
        padded = True
    else:
        rows = total // lanes
        flat = x.reshape(-1)
        padded = False
    x2d = flat.reshape(rows, lanes)

    # Block rows: dtype-aware sublane granularity (8 f32 / 16 bf16 / 32 int8),
    # capped at ~_MAX_BLOCK_BYTES, with >= 2 blocks whenever there is enough
    # work so both v7x TensorCores get a share of the "parallel" grid axis.
    itemsize = jnp.dtype(x.dtype).itemsize
    sub = max(8, 32 // itemsize)
    max_block_rows = max(sub, (_MAX_BLOCK_BYTES // (lanes * itemsize)) // sub * sub)
    if rows <= sub:
        block_rows = rows                      # block == full dim: always legal
    else:
        n_target = max(2, _cdiv(rows, max_block_rows))
        block_rows = min(max_block_rows, _round_up(_cdiv(rows, n_target), sub))
    n_blocks = _cdiv(rows, block_rows)         # last block may be partial (masked)

    kernel = functools.partial(
        _lrelu_drop_kernel,
        negative_slope=float(negative_slope),
        keep_prob=float(keep_prob),
        block_rows=block_rows,
        lanes=lanes,
    )

    seed_arr = jnp.asarray([seed], dtype=jnp.int32)

    out2d = pl.pallas_call(
        kernel,
        out_shape=jax.ShapeDtypeStruct((rows, lanes), x.dtype),
        grid_spec=pltpu.PrefetchScalarGridSpec(
            num_scalar_prefetch=1,
            grid=(n_blocks,),
            in_specs=[pl.BlockSpec((block_rows, lanes), lambda i, seed_ref: (i, 0))],
            out_specs=pl.BlockSpec((block_rows, lanes), lambda i, seed_ref: (i, 0)),
        ),
        compiler_params=pltpu.CompilerParams(
            dimension_semantics=("parallel",),
            vmem_limit_bytes=32 * 1024 * 1024,
        ),
    )(seed_arr, x2d)

    out_flat = out2d.reshape(-1)
    if padded:
        out_flat = out_flat[:total]
    return out_flat.reshape(orig_shape)


if __name__ == "__main__":
    # Small shape consistent with the module (feature-vector activations):
    # batch=2, seq=8, hidden=32.
    B, S, D = 2, 8, 32
    negative_slope = 0.01
    dropout_rate = 0.1

    key = jax.random.PRNGKey(0)
    x = jax.random.normal(key, (B, S, D), dtype=jnp.float32)

    out = lrelu_drop(x, negative_slope=negative_slope,
                     dropout_rate=dropout_rate, seed=0)
    out = jax.block_until_ready(out)

    assert out.shape == x.shape, out.shape

    # Survivors must equal LeakyReLU(x) / keep_prob; dropped fraction plausible.
    keep_prob = 1.0 - dropout_rate
    expected_kept = jnp.where(x > 0, x, x * negative_slope) / keep_prob
    kept_mask = out != 0
    max_err = jnp.max(jnp.abs(jnp.where(kept_mask, out - expected_kept, 0.0)))
    assert float(max_err) < 1e-5, float(max_err)
    drop_frac = 1.0 - float(jnp.mean(kept_mask.astype(jnp.float32)))
    assert 0.0 <= drop_frac <= 0.6, drop_frac

    print("KERNEL_OK")
</pallas_src>

<mosaic_0001>
module attributes {stable_mosaic.version = 11 : i64} {
  func.func @_lrelu_drop_kernel(%arg0: i32, %arg1: memref<1xi32, #tpu.memory_space<smem>>, %arg2: memref<1x512xf32, #tpu.memory_space<vmem>>, %arg3: memref<1x512xf32, #tpu.memory_space<vmem>>) attributes {dimension_semantics = [#tpu.dimension_semantics<parallel>], iteration_bounds = array<i64: 1>, scalar_prefetch = 1 : i64, scratch_operands = 0 : i64, tpu.core_type = #tpu.core_type<tc>, window_params = [{transform_indices = @transform_0, window_bounds = array<i64: 1, 512>}, {transform_indices = @transform_1, window_bounds = array<i64: 1, 512>}]} {
    %c0 = arith.constant 0 : index
    %c0_0 = arith.constant 0 : index
    %0 = vector.load %arg2[%c0, %c0_0] : memref<1x512xf32, #tpu.memory_space<vmem>>, vector<1x512xf32>
    %cst = arith.constant 0.000000e+00 : f32
    %1 = vector.broadcast %cst : f32 to vector<1x512xf32>
    %2 = arith.cmpf ogt, %0, %1 : vector<1x512xf32>
    %cst_1 = arith.constant 0.00999999977 : f32
    %3 = vector.broadcast %cst_1 : f32 to vector<1x512xf32>
    %4 = arith.mulf %0, %3 : vector<1x512xf32>
    %5 = arith.select %2, %0, %4 : vector<1x512xi1>, vector<1x512xf32>
    %cst_2 = arith.constant 1.11111116 : f32
    %6 = vector.broadcast %cst_2 : f32 to vector<1x512xf32>
    %7 = arith.mulf %5, %6 : vector<1x512xf32>
    %8 = tpu.iota {dimensions = array<i32: 0>} : vector<1x512xi32>
    %9 = tpu.iota {dimensions = array<i32: 1>} : vector<1x512xi32>
    %c1_i32 = arith.constant 1 : i32
    %10 = arith.muli %arg0, %c1_i32 : i32
    %11 = vector.broadcast %10 : i32 to vector<1x512xi32>
    %12 = arith.addi %11, %8 : vector<1x512xi32>
    %c512_i32 = arith.constant 512 : i32
    %13 = vector.broadcast %c512_i32 : i32 to vector<1x512xi32>
    %14 = arith.muli %12, %13 : vector<1x512xi32>
    %15 = arith.addi %14, %9 : vector<1x512xi32>
    %c0_3 = arith.constant 0 : index
    %16 = memref.load %arg1[%c0_3] : memref<1xi32, #tpu.memory_space<smem>>
    %c-1640531535_i32 = arith.constant -1640531535 : i32
    %17 = vector.broadcast %c-1640531535_i32 : i32 to vector<1x512xi32>
    %18 = arith.muli %15, %17 : vector<1x512xi32>
    %c-2048144777_i32 = arith.constant -2048144777 : i32
    %19 = arith.muli %16, %c-2048144777_i32 : i32
    %20 = vector.broadcast %19 : i32 to vector<1x512xi32>
    %21 = arith.addi %18, %20 : vector<1x512xi32>
    %c16_i32 = arith.constant 16 : i32
    %22 = vector.broadcast %c16_i32 : i32 to vector<1x512xi32>
    %23 = arith.shrui %21, %22 : vector<1x512xi32>
    %24 = arith.xori %21, %23 : vector<1x512xi32>
    %c-2048144789_i32 = arith.constant -2048144789 : i32
    %25 = vector.broadcast %c-2048144789_i32 : i32 to vector<1x512xi32>
    %26 = arith.muli %24, %25 : vector<1x512xi32>
    %c13_i32 = arith.constant 13 : i32
    %27 = vector.broadcast %c13_i32 : i32 to vector<1x512xi32>
    %28 = arith.shrui %26, %27 : vector<1x512xi32>
    %29 = arith.xori %26, %28 : vector<1x512xi32>
    %c-1028477387_i32 = arith.constant -1028477387 : i32
    %30 = vector.broadcast %c-1028477387_i32 : i32 to vector<1x512xi32>
    %31 = arith.muli %29, %30 : vector<1x512xi32>
    %c16_i32_4 = arith.constant 16 : i32
    %32 = vector.broadcast %c16_i32_4 : i32 to vector<1x512xi32>
    %33 = arith.shrui %31, %32 : vector<1x512xi32>
    %34 = arith.xori %31, %33 : vector<1x512xi32>
    %c-429496730_i32 = arith.constant -429496730 : i32
    %35 = vector.broadcast %c-429496730_i32 : i32 to vector<1x512xi32>
    %36 = arith.cmpi ult, %34, %35 : vector<1x512xi32>
    %cst_5 = arith.constant 0.000000e+00 : f32
    %37 = vector.broadcast %cst_5 : f32 to vector<1x512xf32>
    %38 = arith.select %36, %7, %37 : vector<1x512xi1>, vector<1x512xf32>
    %c0_6 = arith.constant 0 : index
    %c0_7 = arith.constant 0 : index
    %39 = vector.load %arg3[%c0_6, %c0_7] : memref<1x512xf32, #tpu.memory_space<vmem>>, vector<1x512xf32>
    tpu.vector_store %arg3[%c0_6, %c0_7], %38 {strides = array<i32>} : memref<1x512xf32, #tpu.memory_space<vmem>>, vector<1x512xf32>,
    return
  }
  func.func @transform_0(%arg0: i32, %arg1: memref<1xi32, #tpu.memory_space<smem>>) -> (i32, i32) {
    %c0_i32 = arith.constant 0 : i32
    %c0_i32_0 = arith.constant 0 : i32
    return %arg0, %c0_i32 : i32, i32
  }
  func.func @transform_1(%arg0: i32, %arg1: memref<1xi32, #tpu.memory_space<smem>>) -> (i32, i32) {
    %c0_i32 = arith.constant 0 : i32
    %c0_i32_0 = arith.constant 0 : i32
    return %arg0, %c0_i32 : i32, i32
  }
}

</mosaic_0001>

<llo_original>
// kernel: tpu_custom_call.1
$region0: #{tpu_custom_call.1}
  #allocation0 [shape = 'u32[]', space=smem, size = 0x4, offset = 0x4, fixed_abs, tag = 'smem constant byte address 0x4 - core index']
  #allocation1 [shape = 'u32[144,128]{1,0:T(1,128)}', space=vmem, size = 0x12000, scoped, tag = 'internal scratch']
  #allocation2 [shape = 's32[1]{0}', space=sflag, size = 0x4, scoped, tag = 'scoped memory for tpu_custom_call.1']
  #allocation3 [shape = 's32[1]{0:T(128)S(6)}', space=smem, size = 0x200, scoped, tag = 'prefetched SMEM operand 0']
  %s0 = inlined_call_operand.<no memory space> [shape: s32[1], index: 0, kind: input, shape index: {}]
  %s1 = inlined_call_operand.hbm [shape: f32[1,512], index: 1, kind: input, shape index: {}]
  %s2 = inlined_call_operand.hbm [shape: f32[1,512], index: 2, kind: output, shape index: {}]
  %s3 = sld [smem:[#allocation0]]
  $region18: #{tpu_custom_call.1} parent=0
    _
  %s5 = ssub.s32 1, %s3
  %s6 = scalar_select 0, %s5, %s3
  %7 = sst [smem:[#allocation3]] %s0
  $region1: #{tpu_custom_call.1} parent=0
    #allocation4 [shape = 'u8[2048]{0}', space=vmem, size = 0x800, scoped, tag = 'input window, operand 1, single buffered']
    #allocation5 [shape = 's32[1]{0}', space=sflag, size = 0x4, scoped, tag = 'scoped memory for tpu_custom_call.1']
    #allocation6 [shape = 's32[1]{0}', space=sflag, size = 0x4, scoped, tag = 'scoped memory for tpu_custom_call.1']
    #allocation7 [shape = 'u8[2048]{0}', space=vmem, size = 0x800, scoped, tag = 'output window, operand 0, single buffered']
    %8 = vsyncpa [#allocation5], 0
    %9 = vsyncpa [#allocation6], 0
    // Predicated region
    $region2: #{tpu_custom_call.1} parent=1 // pred_check
      _
    $region3: #{tpu_custom_call.1} parent=1 // pred_check_branch
      %11 = sbr.rel (0) target = $region5
    $region4: #{tpu_custom_call.1} parent=1 // pred_region
      %s13 = ssub.s32 64, 64
      %14 = vsyncadd [#allocation5], %s13
      %s16 = sshll.u32 [#allocation4], 4
      %s17 = int_to_ptr.vmem [resolvable:$true] %s16
      %19 = dma.hbm_to_vmem [thread:$0]  %s1, 64, %s17, [#allocation5]
    $region5: #{tpu_custom_call.1} parent=1 // pred_fallthru
      _
    // Predicated region
    $region6: #{tpu_custom_call.1} parent=1 // pred_check
      _
    $region7: #{tpu_custom_call.1} parent=1 // pred_check_branch
      %21 = sbr.rel (0) target = $region9
    $region8: #{tpu_custom_call.1} parent=1 // pred_region
      %22 = dma.done [#allocation5], 64
    $region9: #{tpu_custom_call.1} parent=1 // pred_fallthru
      _
    %v23 = vld [vmem:[#allocation4] sm:$0xf]
    %vm24 = vcmp.gt.f32.partialorder %v23, 0.0
    %v25 = vmul.f32 %v23, 0.01
    %v26 = vsel %vm24, %v23, %v25
    %v27 = vmul.f32 %v26, 1.1111112
    %v28 = vlaneseq
    %v29 = vshrl.u32 %v28, 7
    %v30 = vlaneseq
    %v31 = vand.u32 %v30, 127
    %v32 = vadd.s32 %v31, 128
    %v33 = vadd.s32 %v31, 256
    %v34 = vadd.s32 %v31, 384
    %v35 = vstv 0
    %v36 = vadd.s32 %v35, %v29
    %v37 = vmul.u32 %v36, 512
    %v38 = vadd.s32 %v37, %v31
    %v39 = vadd.s32 %v37, %v32
    %v40 = vadd.s32 %v37, %v33
    %v41 = vadd.s32 %v37, %v34
    %s42 = sld [smem:[#allocation3]]
    %v43 = vmul.u32 %v38, 2654435761
    %v44 = vmul.u32 %v39, 2654435761
    %v45 = vmul.u32 %v40, 2654435761
    %v46 = vmul.u32 %v41, 2654435761
    %s47 = smul.u32 %s42, 2246822519
    %v48 = vstv %s47
    %v49 = vadd.s32 %v43, %v48
    %v50 = vadd.s32 %v44, %v48
    %v51 = vadd.s32 %v45, %v48
    %v52 = vadd.s32 %v46, %v48
    %v53 = vshrl.u32 %v49, 16
    %v54 = vshrl.u32 %v50, 16
    %v55 = vshrl.u32 %v51, 16
    %v56 = vshrl.u32 %v52, 16
    %v57 = vxor.u32 %v49, %v53
    %v58 = vxor.u32 %v50, %v54
    %v59 = vxor.u32 %v51, %v55
    %v60 = vxor.u32 %v52, %v56
    %v61 = vmul.u32 %v57, 2246822507
    %v62 = vmul.u32 %v58, 2246822507
    %v63 = vmul.u32 %v59, 2246822507
    %v64 = vmul.u32 %v60, 2246822507
    %v65 = vshrl.u32 %v61, 13
    %v66 = vshrl.u32 %v62, 13
    %v67 = vshrl.u32 %v63, 13
    %v68 = vshrl.u32 %v64, 13
    %v69 = vxor.u32 %v61, %v65
    %v70 = vxor.u32 %v62, %v66
    %v71 = vxor.u32 %v63, %v67
    %v72 = vxor.u32 %v64, %v68
    %v73 = vmul.u32 %v69, 3266489909
    %v74 = vmul.u32 %v70, 3266489909
    %v75 = vmul.u32 %v71, 3266489909
    %v76 = vmul.u32 %v72, 3266489909
    %v77 = vshrl.u32 %v73, 16
    %v78 = vshrl.u32 %v74, 16
    %v79 = vshrl.u32 %v75, 16
    %v80 = vshrl.u32 %v76, 16
    %v81 = vxor.u32 %v73, %v77
    %v82 = vxor.u32 %v74, %v78
    %v83 = vxor.u32 %v75, %v79
    %v84 = vxor.u32 %v76, %v80
    %vm85 = vcmp.lt.u32.totalorder %v81, 3865470566
    %vm86 = vcmp.lt.u32.totalorder %v82, 3865470566
    %vm87 = vcmp.lt.u32.totalorder %v83, 3865470566
    %vm88 = vcmp.lt.u32.totalorder %v84, 3865470566
    %v90 = vlaneseq
    %v91 = vshrl.u32 %v90, 7
    %v92 = vsub.s32 0, %v91
    %v93 = vrot.slane %v27, %v92
    %v94 = vlaneseq
    %v95 = vshrl.u32 %v94, 7
    %v96 = vsub.s32 1, %v95
    %v97 = vrot.slane %v27, %v96
    %v98 = vlaneseq
    %v99 = vshrl.u32 %v98, 7
    %v100 = vsub.s32 2, %v99
    %v101 = vrot.slane %v27, %v100
    %v102 = vlaneseq
    %v103 = vshrl.u32 %v102, 7
    %v104 = vsub.s32 3, %v103
    %v105 = vrot.slane %v27, %v104
    %v110 = vsel %vm85, %v93, 0.0
    %v111 = vsel %vm86, %v97, 0.0
    %v112 = vsel %vm87, %v101, 0.0
    %v113 = vsel %vm88, %v105, 0.0
    %v118 = vcombine.low %v110, %v111
    %v119 = vcombine.low %v112, %v113
    %v121 = vunpack.c.l.s4 1966171168
    %v122 = vunpack.c.0.s8 %v121
    %v123 = vlaneseq
    %v124 = vshrl.u32 %v123, 7
    %v125 = vsub.s32 %v122, %v124
    %v126 = vrot.slane %v118, %v125
    %v128 = vunpack.c.l.s4 1966171168
    %v129 = vunpack.c.0.s8 %v128
    %v130 = vlaneseq
    %v131 = vshrl.u32 %v130, 7
    %v132 = vsub.s32 %v129, %v131
    %v133 = vrot.slane %v119, %v132
    %v134 = vcombine.low %v126, %v133
    %v136 = vunpack.c.l.s4 1966171168
    %v137 = vunpack.c.0.s8 %v136
    %v138 = vlaneseq
    %v139 = vshrl.u32 %v138, 7
    %v140 = vsub.s32 %v137, %v139
    %v141 = vrot.slane %v134, %v140
    %v143 = vlaneseq
    %vm144 = vcmp.ge.s32.totalorder %v143, 0
    %vm145 = vcmp.lt.s32.totalorder %v143, 512
    %vm146 = vmand %vm144, %vm145
    %147 = vst.msk [vmem:[#allocation7] sm:$0xf] %vm146, %v141
    // Predicated region
    $region10: #{tpu_custom_call.1} parent=1 // pred_check
      _
    $region11: #{tpu_custom_call.1} parent=1 // pred_check_branch
      %149 = sbr.rel (0) target = $region13
    $region12: #{tpu_custom_call.1} parent=1 // pred_region
      %s151 = ssub.s32 64, 64
      %152 = vsyncadd [#allocation6], %s151
      %s154 = sshll.u32 [#allocation7], 4
      %s155 = int_to_ptr.vmem [resolvable:$true] %s154
      %157 = dma.vmem_to_hbm [thread:$0]  %s155, 64, %s2, [#allocation6]
    $region13: #{tpu_custom_call.1} parent=1 // pred_fallthru
      _
    // Predicated region
    $region14: #{tpu_custom_call.1} parent=1 // pred_check
      _
    $region15: #{tpu_custom_call.1} parent=1 // pred_check_branch
      %159 = sbr.rel (0) target = $region17
    $region16: #{tpu_custom_call.1} parent=1 // pred_region
      %160 = dma.done [#allocation6], 64
    $region17: #{tpu_custom_call.1} parent=1 // pred_fallthru
      _
    %161 = vsyncpa [#allocation5], 1
    %162 = vsyncpa [#allocation6], 1

</llo_original>
